<compile_context>
chip_gen: v5e
topology: v5e:2x2
jax: 0.10.0
libtpu: 0.0.40
codegen_flags: <defaults>
</compile_context>

<pallas_src>
import jax
import jax.numpy as jnp
from jax.experimental import pallas as pl
from jax.experimental.pallas import tpu as pltpu

# -----------------------------------------------------------------------------
# Tiling / VMEM budgets (portable across v5e / v6e / v7x).
# -----------------------------------------------------------------------------
_VMEM_INPUT_BUDGET = 8 * 1024 * 1024      # double-buffered input blocks
_VMEM_LIMIT_BYTES = 32 * 1024 * 1024      # explicitly requested scoped VMEM


def _ceil_to(x, m):
    return -(-x // m) * m


def _pick_lane_tile(L, bytes_per_lane, budget=_VMEM_INPUT_BUDGET):
    """Largest lane tile (multiple of 128 dividing L, or L itself) whose
    double-buffered input blocks stay under `budget` bytes."""
    if L % 128 != 0:
        return L                        # whole-lane block (full dim is always legal)
    cap = budget // max(1, 2 * bytes_per_lane)
    best = 128
    t = 128
    while t <= L:
        if L % t == 0 and t <= cap:
            best = t
        t += 128
    return best


def _safe_inv(x):
    # Guard against a constant BEV map (max == min): inv = 0 instead of inf/NaN.
    nonzero = x != 0
    return jnp.where(nonzero, 1.0 / jnp.where(nonzero, x, 1.0), 0.0)


def _block_mask(ta_n, gt_blk, use_nz):
    """bev_loss_mask for the current block, shape (B, 1, T).  ta_n is the
    normalized TA block (B, C, T); channel sum is complete per block."""
    mask = None
    if use_nz:
        s = jnp.sum(ta_n, axis=1, keepdims=True)                   # (B, 1, T)
        mask = jnp.where(s != 0, jnp.float32(1.0), jnp.float32(0.05))
    if gt_blk is not None:
        g = gt_blk.astype(jnp.float32)
        mask = g if mask is None else mask * g
    return mask


# -----------------------------------------------------------------------------
# Pass 1: global min / max of the TA BEV and the student BEV.
# grid = (split, lane_block); accumulators are (1,1,1) blocks, one row per split.
# -----------------------------------------------------------------------------
def _minmax_kernel(ta_ref, img_ref, min_ta_ref, max_ta_ref, min_img_ref, max_img_ref):
    j = pl.program_id(1)

    @pl.when(j == 0)
    def _():
        min_ta_ref[...] = jnp.full(min_ta_ref.shape, jnp.inf, jnp.float32)
        max_ta_ref[...] = jnp.full(max_ta_ref.shape, -jnp.inf, jnp.float32)
        min_img_ref[...] = jnp.full(min_img_ref.shape, jnp.inf, jnp.float32)
        max_img_ref[...] = jnp.full(max_img_ref.shape, -jnp.inf, jnp.float32)

    ta = ta_ref[...].astype(jnp.float32)
    img = img_ref[...].astype(jnp.float32)
    min_ta_ref[...] = jnp.minimum(min_ta_ref[...], jnp.min(ta))
    max_ta_ref[...] = jnp.maximum(max_ta_ref[...], jnp.max(ta))
    min_img_ref[...] = jnp.minimum(min_img_ref[...], jnp.min(img))
    max_img_ref[...] = jnp.maximum(max_img_ref[...], jnp.max(img))


# -----------------------------------------------------------------------------
# Pass 2: global max of |normalize(TA) - bev_lidar| plus the ipk partial sum
#         sum((TA_n - img_n)^2 [* mask])   [+ sum(mask) for the normalizer].
# params (SMEM f32[4]): [min_ta, inv_rng_ta, min_img, inv_rng_img]
# -----------------------------------------------------------------------------
def _pass2_kernel(params_ref, ta_ref, img_ref, lidar_ref, maxd_ref, ipk_ref):
    j = pl.program_id(1)

    @pl.when(j == 0)
    def _():
        maxd_ref[...] = jnp.full(maxd_ref.shape, -jnp.inf, jnp.float32)
        ipk_ref[...] = jnp.zeros(ipk_ref.shape, jnp.float32)

    ta_n = (ta_ref[...].astype(jnp.float32) - params_ref[0]) * params_ref[1]
    img_n = (img_ref[...].astype(jnp.float32) - params_ref[2]) * params_ref[3]
    lidar = lidar_ref[...].astype(jnp.float32)

    d = jnp.abs(ta_n - lidar)
    maxd_ref[...] = jnp.maximum(maxd_ref[...], jnp.max(d))
    ipk_ref[...] = ipk_ref[...] + jnp.sum((ta_n - img_n) ** 2)


def _make_pass2_masked(use_nz, has_gt):
    def kernel(params_ref, ta_ref, img_ref, lidar_ref, *rest):
        if has_gt:
            gt_ref, maxd_ref, ipk_ref, msum_ref = rest
        else:
            maxd_ref, ipk_ref, msum_ref = rest
            gt_ref = None
        j = pl.program_id(1)

        @pl.when(j == 0)
        def _():
            maxd_ref[...] = jnp.full(maxd_ref.shape, -jnp.inf, jnp.float32)
            ipk_ref[...] = jnp.zeros(ipk_ref.shape, jnp.float32)
            msum_ref[...] = jnp.zeros(msum_ref.shape, jnp.float32)

        ta_n = (ta_ref[...].astype(jnp.float32) - params_ref[0]) * params_ref[1]
        img_n = (img_ref[...].astype(jnp.float32) - params_ref[2]) * params_ref[3]
        lidar = lidar_ref[...].astype(jnp.float32)

        d = jnp.abs(ta_n - lidar)                      # threshold max is unmasked
        maxd_ref[...] = jnp.maximum(maxd_ref[...], jnp.max(d))

        mask = _block_mask(ta_n, gt_ref[...] if has_gt else None, use_nz)
        ipk_ref[...] = ipk_ref[...] + jnp.sum((ta_n - img_n) ** 2 * mask)
        msum_ref[...] = msum_ref[...] + jnp.sum(mask)

    return kernel


# -----------------------------------------------------------------------------
# Pass 3: threshold + lpk partial sum  sum((bev_diff - bev_img_copy)^2 [* mask]).
# params (SMEM f32[3]): [min_ta, inv_rng_ta, thresh]
# -----------------------------------------------------------------------------
def _pass3_kernel(params_ref, ta_ref, lidar_ref, copy_ref, lpk_ref):
    j = pl.program_id(1)

    @pl.when(j == 0)
    def _():
        lpk_ref[...] = jnp.zeros(lpk_ref.shape, jnp.float32)

    ta_n = (ta_ref[...].astype(jnp.float32) - params_ref[0]) * params_ref[1]
    d = jnp.abs(ta_n - lidar_ref[...].astype(jnp.float32))
    d = jnp.where(d < params_ref[2], jnp.float32(0.0), d)
    lpk_ref[...] = lpk_ref[...] + jnp.sum((d - copy_ref[...].astype(jnp.float32)) ** 2)


def _make_pass3_masked(use_nz, has_gt):
    def kernel(params_ref, ta_ref, lidar_ref, copy_ref, *rest):
        if has_gt:
            gt_ref, lpk_ref = rest
        else:
            (lpk_ref,) = rest
            gt_ref = None
        j = pl.program_id(1)

        @pl.when(j == 0)
        def _():
            lpk_ref[...] = jnp.zeros(lpk_ref.shape, jnp.float32)

        ta_n = (ta_ref[...].astype(jnp.float32) - params_ref[0]) * params_ref[1]
        d = jnp.abs(ta_n - lidar_ref[...].astype(jnp.float32))
        d = jnp.where(d < params_ref[2], jnp.float32(0.0), d)
        mask = _block_mask(ta_n, gt_ref[...] if has_gt else None, use_nz)
        lpk_ref[...] = lpk_ref[...] + jnp.sum(
            (d - copy_ref[...].astype(jnp.float32)) ** 2 * mask)

    return kernel


# -----------------------------------------------------------------------------
# Wrapper: plain-JAX glue (free reshapes, scalar combining).
# -----------------------------------------------------------------------------
def cmkd_takd_forward(batch_dict, *, use_nonzero_mask=False, calculate_bev_loss=True,
                      lane_tile=None):
    bev_img = batch_dict['spatial_features']
    bev_img_copy = batch_dict['spatial_features_copy']
    bev_ta = batch_dict['spatial_features_target']
    bev_lidar = batch_dict['bev_lidar']
    gt_mask = batch_dict.get('gt_mask', None)           # original: `if gt_mask:`
    loss_rpn = batch_dict.get('loss_rpn', jnp.float32(0.0))

    if not calculate_bev_loss:
        loss_bev = jnp.float32(0.0)
        return {'loss': loss_bev + loss_rpn}, {'bev_loss': loss_bev}, {}

    B, C, H, W = bev_ta.shape
    L, R = H * W, B * C
    has_gt = gt_mask is not None
    masked = has_gt or use_nonzero_mask
    itemsize = max(x.dtype.itemsize for x in (bev_ta, bev_img, bev_img_copy, bev_lidar))

    # Worst-case lane-column byte weight (passes 2/3: 3 tensor streams [+ gt mask]),
    # accounting for sublane padding of each slab to a multiple of 8 rows.
    if masked:
        bytes_per_lane = 3 * B * _ceil_to(C, 8) * itemsize
        if has_gt:
            bytes_per_lane += B * 8 * 4
    else:
        bytes_per_lane = 3 * _ceil_to(R, 8) * itemsize

    if lane_tile is None:
        T = _pick_lane_tile(L, bytes_per_lane)
    else:
        assert L % lane_tile == 0 and (lane_tile % 128 == 0 or lane_tile == L)
        T = lane_tile

    nj_total = L // T
    # Leading "parallel" axis of size 2 = one lane-half per TensorCore on v7x;
    # on single-TC v5e/v6e it is just an outer loop.
    S = 2 if (nj_total >= 2 and nj_total % 2 == 0) else 1
    nj = nj_total // S
    grid = (S, nj)

    # Views in the *native* input dtype (no wrapper-side upcast); the reshapes only
    # collapse contiguous dims so they are free.
    if masked:
        ta_v = bev_ta.reshape(B, C, L)
        img_v = bev_img.reshape(B, C, L)
        copy_v = bev_img_copy.reshape(B, C, L)
        lidar_v = bev_lidar.reshape(B, C, L)
        tensor_spec = lambda: pl.BlockSpec((B, C, T), lambda c, j: (0, 0, c * nj + j))
        if has_gt:
            gt_v = jnp.asarray(gt_mask, jnp.float32).reshape(B, 1, L)
            gt_spec = pl.BlockSpec((B, 1, T), lambda c, j: (0, 0, c * nj + j))
    else:
        ta_v = bev_ta.reshape(R, L)
        img_v = bev_img.reshape(R, L)
        copy_v = bev_img_copy.reshape(R, L)
        lidar_v = bev_lidar.reshape(R, L)
        tensor_spec = lambda: pl.BlockSpec((R, T), lambda c, j: (0, c * nj + j))

    acc_spec = lambda: pl.BlockSpec((1, 1, 1), lambda c, j: (c, 0, 0))
    acc_shape = jax.ShapeDtypeStruct((S, 1, 1), jnp.float32)
    smem_spec = pl.BlockSpec(memory_space=pltpu.MemorySpace.SMEM)
    cparams = pltpu.CompilerParams(
        dimension_semantics=("parallel", "arbitrary"),
        vmem_limit_bytes=_VMEM_LIMIT_BYTES)

    nbytes = lambda x: x.size * x.dtype.itemsize
    n_elems = R * L

    # ---- pass 1: global min / max ------------------------------------------
    mins_ta, maxs_ta, mins_img, maxs_img = pl.pallas_call(
        _minmax_kernel,
        grid=grid,
        in_specs=[tensor_spec(), tensor_spec()],
        out_specs=[acc_spec() for _ in range(4)],
        out_shape=[acc_shape] * 4,
        compiler_params=cparams,
        cost_estimate=pl.CostEstimate(
            flops=4 * n_elems, transcendentals=0,
            bytes_accessed=nbytes(ta_v) + nbytes(img_v)),
    )(ta_v, img_v)

    min_ta, max_ta = jnp.min(mins_ta), jnp.max(maxs_ta)
    min_img, max_img = jnp.min(mins_img), jnp.max(maxs_img)
    inv_ta = _safe_inv(max_ta - min_ta)
    inv_img = _safe_inv(max_img - min_img)

    # ---- pass 2: max|norm(TA) - lidar| + ipk partial sum (+ mask sum) -------
    params2 = jnp.stack([min_ta, inv_ta, min_img, inv_img]).astype(jnp.float32)
    if masked:
        p2_specs = [smem_spec, tensor_spec(), tensor_spec(), tensor_spec()]
        p2_args = [params2, ta_v, img_v, lidar_v]
        p2_bytes = nbytes(ta_v) + nbytes(img_v) + nbytes(lidar_v)
        if has_gt:
            p2_specs.append(gt_spec)
            p2_args.append(gt_v)
            p2_bytes += nbytes(gt_v)
        maxd_out, ipk_out, msum_out = pl.pallas_call(
            _make_pass2_masked(use_nonzero_mask, has_gt),
            grid=grid,
            in_specs=p2_specs,
            out_specs=[acc_spec(), acc_spec(), acc_spec()],
            out_shape=[acc_shape] * 3,
            compiler_params=cparams,
            cost_estimate=pl.CostEstimate(
                flops=14 * n_elems, transcendentals=0, bytes_accessed=p2_bytes),
        )(*p2_args)
        sum_mask = jnp.sum(msum_out)
        normalizer = jnp.float32(B * H * W) / sum_mask      # mask.numel()/mask.sum()
    else:
        maxd_out, ipk_out = pl.pallas_call(
            _pass2_kernel,
            grid=grid,
            in_specs=[smem_spec, tensor_spec(), tensor_spec(), tensor_spec()],
            out_specs=[acc_spec(), acc_spec()],
            out_shape=[acc_shape, acc_shape],
            compiler_params=cparams,
            cost_estimate=pl.CostEstimate(
                flops=10 * n_elems, transcendentals=0,
                bytes_accessed=nbytes(ta_v) + nbytes(img_v) + nbytes(lidar_v)),
        )(params2, ta_v, img_v, lidar_v)
        normalizer = jnp.float32(1.0)       # all-ones mask: numel / sum == 1

    thresh = (3.0 / 5.0) * jnp.max(maxd_out)
    sum_ipk = jnp.sum(ipk_out)

    # ---- pass 3: threshold + lpk partial sum ---------------------------------
    params3 = jnp.stack([min_ta, inv_ta, thresh]).astype(jnp.float32)
    p3_specs = [smem_spec, tensor_spec(), tensor_spec(), tensor_spec()]
    p3_args = [params3, ta_v, lidar_v, copy_v]
    p3_bytes = nbytes(ta_v) + nbytes(lidar_v) + nbytes(copy_v)
    if masked:
        p3_kernel = _make_pass3_masked(use_nonzero_mask, has_gt)
        if has_gt:
            p3_specs.append(gt_spec)
            p3_args.append(gt_v)
            p3_bytes += nbytes(gt_v)
    else:
        p3_kernel = _pass3_kernel

    lpk_out = pl.pallas_call(
        p3_kernel,
        grid=grid,
        in_specs=p3_specs,
        out_specs=acc_spec(),
        out_shape=acc_shape,
        compiler_params=cparams,
        cost_estimate=pl.CostEstimate(
            flops=12 * n_elems, transcendentals=0, bytes_accessed=p3_bytes),
    )(*p3_args)
    sum_lpk = jnp.sum(lpk_out)

    # ---- combine (MSE means * normalizer, loss_bev = ipk + 0.2*lpk) ---------
    nf = jnp.float32(n_elems)
    loss_lpk = (sum_lpk / nf) * normalizer
    loss_ipk = (sum_ipk / nf) * normalizer
    loss_bev = loss_ipk + 0.2 * loss_lpk
    loss = loss_bev + loss_rpn

    return {'loss': loss}, {'bev_loss': loss_bev}, {}


# -----------------------------------------------------------------------------
# Pure-JAX reference of the same math (mirrors CMKD_TAKD.get_training_loss).
# -----------------------------------------------------------------------------
def _reference(bev_img, bev_img_copy, bev_lidar, bev_ta, loss_rpn=0.0,
               use_nonzero_mask=False, gt_mask=None):
    f32 = lambda x: x.astype(jnp.float32)
    bev_img, bev_img_copy, bev_lidar, bev_ta = map(
        f32, (bev_img, bev_img_copy, bev_lidar, bev_ta))

    def norm(x):
        x = x - jnp.min(x)
        return x / jnp.max(x)

    B, C, H, W = bev_ta.shape
    ta_n = norm(bev_ta)
    img_n = norm(bev_img)
    diff = jnp.abs(ta_n - bev_lidar)
    diff = jnp.where(diff < (3.0 / 5.0) * jnp.max(diff), 0.0, diff)
    mask = jnp.ones((B, 1, H, W), jnp.float32)
    if gt_mask is not None:
        mask = mask * gt_mask.astype(jnp.float32)
    if use_nonzero_mask:
        nz = (jnp.sum(ta_n, axis=1, keepdims=True) != 0).astype(jnp.float32)
        nz = jnp.where(nz == 0, 0.05, nz)
        mask = mask * nz
    normalizer = mask.size / jnp.sum(mask)
    lpk = jnp.mean((diff - bev_img_copy) ** 2 * mask) * normalizer
    ipk = jnp.mean((ta_n - img_n) ** 2 * mask) * normalizer
    loss_bev = ipk + 0.2 * lpk
    return loss_bev + loss_rpn


# -----------------------------------------------------------------------------
# Demo / self-check.
# -----------------------------------------------------------------------------
def _make_case(key, B, C, H, W, dtype, zero_strip=False):
    k1, k2, k3, k4 = jax.random.split(key, 4)
    shp = (B, C, H, W)
    bev_img = jax.random.normal(k1, shp, jnp.float32)
    bev_img_copy = jax.random.normal(k2, shp, jnp.float32)
    bev_lidar = jax.random.normal(k3, shp, jnp.float32)
    bev_ta = jax.random.normal(k4, shp, jnp.float32)
    if zero_strip:
        # force a spatial strip to the global minimum in every channel so the
        # nonzero mask picks up non-trivial 0.05 entries
        bev_ta = bev_ta.at[:, :, :2, :].set(-10.0)
    to = lambda x: x.astype(dtype)
    return to(bev_img), to(bev_img_copy), to(bev_lidar), to(bev_ta)


if __name__ == "__main__":
    root = jax.random.PRNGKey(0)

    cases = [
        # (name,             B, C, H,  W,  dtype,        nonzero_mask, gt,    lane_tile, zero_strip)
        ("f32_fast_path",    2, 4, 16, 16, jnp.float32,  False,        False, None,      False),
        ("f32_nonzero_mask", 2, 4, 16, 16, jnp.float32,  True,         False, 128,       True),
        ("f32_gt_and_nz",    2, 4, 16, 16, jnp.float32,  True,         True,  128,       True),
        ("bf16_multiblock",  2, 4, 16, 32, jnp.bfloat16, False,        False, 128,       False),
    ]

    for i, (name, B, C, H, W, dtype, use_nz, with_gt, lane_tile, zero_strip) in enumerate(cases):
        key = jax.random.fold_in(root, i)
        bev_img, bev_img_copy, bev_lidar, bev_ta = _make_case(
            key, B, C, H, W, dtype, zero_strip)

        gt = None
        if with_gt:
            kg = jax.random.fold_in(key, 97)
            gt = (jax.random.uniform(kg, (B, 1, H, W)) > 0.3).astype(jnp.float32)

        batch_dict = {
            'spatial_features': bev_img,
            'spatial_features_copy': bev_img_copy,
            'spatial_features_target': bev_ta,
            'bev_lidar': bev_lidar,          # teacher BEV output (external module)
            'loss_rpn': jnp.float32(0.0),    # student RPN/depth loss (external module)
        }
        if gt is not None:
            batch_dict['gt_mask'] = gt

        ret_dict, tb_dict, disp_dict = cmkd_takd_forward(
            batch_dict, use_nonzero_mask=use_nz, lane_tile=lane_tile)
        loss = jax.block_until_ready(ret_dict['loss'])

        ref = _reference(bev_img, bev_img_copy, bev_lidar, bev_ta,
                         use_nonzero_mask=use_nz, gt_mask=gt)
        got, want = float(loss), float(ref)
        assert abs(got - want) <= 1e-3 * max(1.0, abs(want)), (name, got, want)

    print("KERNEL_OK")
</pallas_src>

<mosaic_0001>
module attributes {stable_mosaic.version = 11 : i64} {
  func.func @_minmax_kernel(%arg0: i32, %arg1: i32, %arg2: memref<8x256xf32, #tpu.memory_space<vmem>>, %arg3: memref<8x256xf32, #tpu.memory_space<vmem>>, %arg4: memref<1x1x1xf32, #tpu.memory_space<vmem>>, %arg5: memref<1x1x1xf32, #tpu.memory_space<vmem>>, %arg6: memref<1x1x1xf32, #tpu.memory_space<vmem>>, %arg7: memref<1x1x1xf32, #tpu.memory_space<vmem>>) attributes {dimension_semantics = [#tpu.dimension_semantics<parallel>, #tpu.dimension_semantics<arbitrary>], iteration_bounds = array<i64: 1, 1>, scalar_prefetch = 0 : i64, scratch_operands = 0 : i64, tpu.core_type = #tpu.core_type<tc>, window_params = [{transform_indices = @transform_0, window_bounds = array<i64: 8, 256>}, {transform_indices = @transform_1, window_bounds = array<i64: 8, 256>}, {transform_indices = @transform_2, window_bounds = array<i64: 1, 1, 1>}, {transform_indices = @transform_3, window_bounds = array<i64: 1, 1, 1>}, {transform_indices = @transform_4, window_bounds = array<i64: 1, 1, 1>}, {transform_indices = @transform_5, window_bounds = array<i64: 1, 1, 1>}]} {
    %c0_i32 = arith.constant 0 : i32
    %0 = arith.cmpi eq, %arg1, %c0_i32 : i32
    %1 = arith.extui %0 : i1 to i32
    %c0_i32_0 = arith.constant 0 : i32
    %2 = arith.cmpi ne, %1, %c0_i32_0 : i32
    scf.if %2 {
      %cst_31 = arith.constant 0x7F800000 : f32
      %37 = vector.broadcast %cst_31 : f32 to vector<1x1x1xf32>
      %c0_32 = arith.constant 0 : index
      %c0_33 = arith.constant 0 : index
      %c0_34 = arith.constant 0 : index
      %38 = vector.load %arg4[%c0_32, %c0_33, %c0_34] : memref<1x1x1xf32, #tpu.memory_space<vmem>>, vector<1x1x1xf32>
      tpu.vector_store %arg4[%c0_32, %c0_33, %c0_34], %37 {strides = array<i32>} : memref<1x1x1xf32, #tpu.memory_space<vmem>>, vector<1x1x1xf32>,
      %cst_35 = arith.constant 0xFF800000 : f32
      %39 = vector.broadcast %cst_35 : f32 to vector<1x1x1xf32>
      %c0_36 = arith.constant 0 : index
      %c0_37 = arith.constant 0 : index
      %c0_38 = arith.constant 0 : index
      %40 = vector.load %arg5[%c0_36, %c0_37, %c0_38] : memref<1x1x1xf32, #tpu.memory_space<vmem>>, vector<1x1x1xf32>
      tpu.vector_store %arg5[%c0_36, %c0_37, %c0_38], %39 {strides = array<i32>} : memref<1x1x1xf32, #tpu.memory_space<vmem>>, vector<1x1x1xf32>,
      %cst_39 = arith.constant 0x7F800000 : f32
      %41 = vector.broadcast %cst_39 : f32 to vector<1x1x1xf32>
      %c0_40 = arith.constant 0 : index
      %c0_41 = arith.constant 0 : index
      %c0_42 = arith.constant 0 : index
      %42 = vector.load %arg6[%c0_40, %c0_41, %c0_42] : memref<1x1x1xf32, #tpu.memory_space<vmem>>, vector<1x1x1xf32>
      tpu.vector_store %arg6[%c0_40, %c0_41, %c0_42], %41 {strides = array<i32>} : memref<1x1x1xf32, #tpu.memory_space<vmem>>, vector<1x1x1xf32>,
      %cst_43 = arith.constant 0xFF800000 : f32
      %43 = vector.broadcast %cst_43 : f32 to vector<1x1x1xf32>
      %c0_44 = arith.constant 0 : index
      %c0_45 = arith.constant 0 : index
      %c0_46 = arith.constant 0 : index
      %44 = vector.load %arg7[%c0_44, %c0_45, %c0_46] : memref<1x1x1xf32, #tpu.memory_space<vmem>>, vector<1x1x1xf32>
      tpu.vector_store %arg7[%c0_44, %c0_45, %c0_46], %43 {strides = array<i32>} : memref<1x1x1xf32, #tpu.memory_space<vmem>>, vector<1x1x1xf32>,
    } else {
    }
    %c0 = arith.constant 0 : index
    %c0_1 = arith.constant 0 : index
    %3 = vector.load %arg2[%c0, %c0_1] : memref<8x256xf32, #tpu.memory_space<vmem>>, vector<8x256xf32>
    %c0_2 = arith.constant 0 : index
    %c0_3 = arith.constant 0 : index
    %4 = vector.load %arg3[%c0_2, %c0_3] : memref<8x256xf32, #tpu.memory_space<vmem>>, vector<8x256xf32>
    %c0_4 = arith.constant 0 : index
    %c0_5 = arith.constant 0 : index
    %c0_6 = arith.constant 0 : index
    %5 = vector.load %arg4[%c0_4, %c0_5, %c0_6] : memref<1x1x1xf32, #tpu.memory_space<vmem>>, vector<1x1x1xf32>
    %6 = vector.shape_cast %3 : vector<8x256xf32> to vector<1x8x256xf32>
    %cst = arith.constant dense<0x7F800000> : vector<1xf32>
    %7 = vector.multi_reduction <minimumf>, %6, %cst [1, 2] : vector<1x8x256xf32> to vector<1xf32>
    %8 = vector.shape_cast %7 : vector<1xf32> to vector<1x1x1xf32>
    %9 = vector.extract %8[0, 0, 0] : f32 from vector<1x1x1xf32>
    %10 = vector.broadcast %9 : f32 to vector<1x1x1xf32>
    %11 = arith.minimumf %5, %10 : vector<1x1x1xf32>
    %c0_7 = arith.constant 0 : index
    %c0_8 = arith.constant 0 : index
    %c0_9 = arith.constant 0 : index
    %12 = vector.load %arg4[%c0_7, %c0_8, %c0_9] : memref<1x1x1xf32, #tpu.memory_space<vmem>>, vector<1x1x1xf32>
    tpu.vector_store %arg4[%c0_7, %c0_8, %c0_9], %11 {strides = array<i32>} : memref<1x1x1xf32, #tpu.memory_space<vmem>>, vector<1x1x1xf32>,
    %c0_10 = arith.constant 0 : index
    %c0_11 = arith.constant 0 : index
    %c0_12 = arith.constant 0 : index
    %13 = vector.load %arg5[%c0_10, %c0_11, %c0_12] : memref<1x1x1xf32, #tpu.memory_space<vmem>>, vector<1x1x1xf32>
    %14 = vector.shape_cast %3 : vector<8x256xf32> to vector<1x8x256xf32>
    %cst_13 = arith.constant dense<0xFF800000> : vector<1xf32>
    %15 = vector.multi_reduction <maximumf>, %14, %cst_13 [1, 2] : vector<1x8x256xf32> to vector<1xf32>
    %16 = vector.shape_cast %15 : vector<1xf32> to vector<1x1x1xf32>
    %17 = vector.extract %16[0, 0, 0] : f32 from vector<1x1x1xf32>
    %18 = vector.broadcast %17 : f32 to vector<1x1x1xf32>
    %19 = arith.maximumf %13, %18 : vector<1x1x1xf32>
    %c0_14 = arith.constant 0 : index
    %c0_15 = arith.constant 0 : index
    %c0_16 = arith.constant 0 : index
    %20 = vector.load %arg5[%c0_14, %c0_15, %c0_16] : memref<1x1x1xf32, #tpu.memory_space<vmem>>, vector<1x1x1xf32>
    tpu.vector_store %arg5[%c0_14, %c0_15, %c0_16], %19 {strides = array<i32>} : memref<1x1x1xf32, #tpu.memory_space<vmem>>, vector<1x1x1xf32>,
    %c0_17 = arith.constant 0 : index
    %c0_18 = arith.constant 0 : index
    %c0_19 = arith.constant 0 : index
    %21 = vector.load %arg6[%c0_17, %c0_18, %c0_19] : memref<1x1x1xf32, #tpu.memory_space<vmem>>, vector<1x1x1xf32>
    %22 = vector.shape_cast %4 : vector<8x256xf32> to vector<1x8x256xf32>
    %cst_20 = arith.constant dense<0x7F800000> : vector<1xf32>
    %23 = vector.multi_reduction <minimumf>, %22, %cst_20 [1, 2] : vector<1x8x256xf32> to vector<1xf32>
    %24 = vector.shape_cast %23 : vector<1xf32> to vector<1x1x1xf32>
    %25 = vector.extract %24[0, 0, 0] : f32 from vector<1x1x1xf32>
    %26 = vector.broadcast %25 : f32 to vector<1x1x1xf32>
    %27 = arith.minimumf %21, %26 : vector<1x1x1xf32>
    %c0_21 = arith.constant 0 : index
    %c0_22 = arith.constant 0 : index
    %c0_23 = arith.constant 0 : index
    %28 = vector.load %arg6[%c0_21, %c0_22, %c0_23] : memref<1x1x1xf32, #tpu.memory_space<vmem>>, vector<1x1x1xf32>
    tpu.vector_store %arg6[%c0_21, %c0_22, %c0_23], %27 {strides = array<i32>} : memref<1x1x1xf32, #tpu.memory_space<vmem>>, vector<1x1x1xf32>,
    %c0_24 = arith.constant 0 : index
    %c0_25 = arith.constant 0 : index
    %c0_26 = arith.constant 0 : index
    %29 = vector.load %arg7[%c0_24, %c0_25, %c0_26] : memref<1x1x1xf32, #tpu.memory_space<vmem>>, vector<1x1x1xf32>
    %30 = vector.shape_cast %4 : vector<8x256xf32> to vector<1x8x256xf32>
    %cst_27 = arith.constant dense<0xFF800000> : vector<1xf32>
    %31 = vector.multi_reduction <maximumf>, %30, %cst_27 [1, 2] : vector<1x8x256xf32> to vector<1xf32>
    %32 = vector.shape_cast %31 : vector<1xf32> to vector<1x1x1xf32>
    %33 = vector.extract %32[0, 0, 0] : f32 from vector<1x1x1xf32>
    %34 = vector.broadcast %33 : f32 to vector<1x1x1xf32>
    %35 = arith.maximumf %29, %34 : vector<1x1x1xf32>
    %c0_28 = arith.constant 0 : index
    %c0_29 = arith.constant 0 : index
    %c0_30 = arith.constant 0 : index
    %36 = vector.load %arg7[%c0_28, %c0_29, %c0_30] : memref<1x1x1xf32, #tpu.memory_space<vmem>>, vector<1x1x1xf32>
    tpu.vector_store %arg7[%c0_28, %c0_29, %c0_30], %35 {strides = array<i32>} : memref<1x1x1xf32, #tpu.memory_space<vmem>>, vector<1x1x1xf32>,
    return
  }
  func.func @transform_0(%arg0: i32, %arg1: i32) -> (i32, i32) {
    %c1_i32 = arith.constant 1 : i32
    %0 = arith.muli %arg0, %c1_i32 : i32
    %1 = arith.addi %0, %arg1 : i32
    %c0_i32 = arith.constant 0 : i32
    %c0_i32_0 = arith.constant 0 : i32
    return %c0_i32, %1 : i32, i32
  }
  func.func @transform_1(%arg0: i32, %arg1: i32) -> (i32, i32) {
    %c1_i32 = arith.constant 1 : i32
    %0 = arith.muli %arg0, %c1_i32 : i32
    %1 = arith.addi %0, %arg1 : i32
    %c0_i32 = arith.constant 0 : i32
    %c0_i32_0 = arith.constant 0 : i32
    return %c0_i32, %1 : i32, i32
  }
  func.func @transform_2(%arg0: i32, %arg1: i32) -> (i32, i32, i32) {
    %c0_i32 = arith.constant 0 : i32
    %c0_i32_0 = arith.constant 0 : i32
    %c0_i32_1 = arith.constant 0 : i32
    return %arg0, %c0_i32, %c0_i32_0 : i32, i32, i32
  }
  func.func @transform_3(%arg0: i32, %arg1: i32) -> (i32, i32, i32) {
    %c0_i32 = arith.constant 0 : i32
    %c0_i32_0 = arith.constant 0 : i32
    %c0_i32_1 = arith.constant 0 : i32
    return %arg0, %c0_i32, %c0_i32_0 : i32, i32, i32
  }
  func.func @transform_4(%arg0: i32, %arg1: i32) -> (i32, i32, i32) {
    %c0_i32 = arith.constant 0 : i32
    %c0_i32_0 = arith.constant 0 : i32
    %c0_i32_1 = arith.constant 0 : i32
    return %arg0, %c0_i32, %c0_i32_0 : i32, i32, i32
  }
  func.func @transform_5(%arg0: i32, %arg1: i32) -> (i32, i32, i32) {
    %c0_i32 = arith.constant 0 : i32
    %c0_i32_0 = arith.constant 0 : i32
    %c0_i32_1 = arith.constant 0 : i32
    return %arg0, %c0_i32, %c0_i32_0 : i32, i32, i32
  }
}

</mosaic_0001>

<llo_original>
// kernel: tpu_custom_call.1
$region0: #{tpu_custom_call.1}
  #allocation0 [shape = 'u32[]', space=smem, size = 0x4, offset = 0x4, fixed_abs, tag = 'smem constant byte address 0x4 - core index']
  #allocation1 [shape = 'u32[72,128]{1,0:T(1,128)}', space=vmem, size = 0x9000, scoped, tag = 'internal scratch']
  %s0 = inlined_call_operand.hbm [shape: f32[8,256], index: 0, kind: input, shape index: {}]
  %s1 = inlined_call_operand.hbm [shape: f32[8,256], index: 1, kind: input, shape index: {}]
  %s2 = inlined_call_operand.hbm [shape: f32[1,1,1], index: 2, kind: output, shape index: {0}]
  %s3 = inlined_call_operand.hbm [shape: f32[1,1,1], index: 3, kind: output, shape index: {1}]
  %s4 = inlined_call_operand.hbm [shape: f32[1,1,1], index: 4, kind: output, shape index: {2}]
  %s5 = inlined_call_operand.hbm [shape: f32[1,1,1], index: 5, kind: output, shape index: {3}]
  %6 = xla_tuple %s2, %s3, %s4, %s5
  %s7 = sld [smem:[#allocation0]]
  $region54: #{tpu_custom_call.1} parent=0
    _
  %s9 = ssub.s32 1, %s7
  %s10 = scalar_select 0, %s9, %s7
  $region1: #{tpu_custom_call.1} parent=0
    #allocation2 [shape = 'u8[8192]{0}', space=vmem, size = 0x2000, scoped, tag = 'input window, operand 0, single buffered']
    #allocation3 [shape = 's32[1]{0}', space=sflag, size = 0x4, scoped, tag = 'scoped memory for tpu_custom_call.1']
    #allocation4 [shape = 's32[1]{0}', space=sflag, size = 0x4, scoped, tag = 'scoped memory for tpu_custom_call.1']
    #allocation5 [shape = 'u8[8192]{0}', space=vmem, size = 0x2000, scoped, tag = 'input window, operand 1, single buffered']
    #allocation6 [shape = 's32[1]{0}', space=sflag, size = 0x4, scoped, tag = 'scoped memory for tpu_custom_call.1']
    #allocation7 [shape = 'u8[512]{0}', space=vmem, size = 0x400, scoped, tag = 'output window, operand 0, single buffered']
    #allocation8 [shape = 'u8[512]{0}', space=vmem, size = 0x400, scoped, tag = 'output window, operand 1, single buffered']
    #allocation9 [shape = 's32[1]{0}', space=sflag, size = 0x4, scoped, tag = 'scoped memory for tpu_custom_call.1']
    #allocation10 [shape = 'u8[512]{0}', space=vmem, size = 0x400, scoped, tag = 'output window, operand 2, single buffered']
    #allocation11 [shape = 'u8[512]{0}', space=vmem, size = 0x400, scoped, tag = 'output window, operand 3, single buffered']
    #allocation12 [shape = 's32[1]{0}', space=sflag, size = 0x4, scoped, tag = 'scoped memory for tpu_custom_call.1']
    %11 = vsyncpa [#allocation3], 0
    %12 = vsyncpa [#allocation6], 0
    %13 = vsyncpa [#allocation4], 0
    %14 = vsyncpa [#allocation9], 0
    %15 = vsyncpa [#allocation12], 0
    // Predicated region
    $region2: #{tpu_custom_call.1} parent=1 // pred_check
      _
    $region3: #{tpu_custom_call.1} parent=1 // pred_check_branch
      %17 = sbr.rel (0) target = $region5
    $region4: #{tpu_custom_call.1} parent=1 // pred_region
      %s18 = sadd.s32 0, 0
      %s19 = smul.u32 2, %s18
      %21 = vsyncadd [#allocation3], 0
      %s22 = smul.addr %s19, 8
      %s23 = scalar_lea.hbm %s0, %s22
      %s25 = sshll.u32 %s23, 4
      %s26 = int_to_ptr.hbm [resolvable:$true] %s25
      %s27 = sshll.u32 [#allocation2], 4
      %s28 = int_to_ptr.vmem [resolvable:$true] %s27
      %30 = dma.hbm_to_vmem [thread:$0]  %s26, 256, %s28, [#allocation3]
    $region5: #{tpu_custom_call.1} parent=1 // pred_fallthru
      _
    // Predicated region
    $region6: #{tpu_custom_call.1} parent=1 // pred_check
      _
    $region7: #{tpu_custom_call.1} parent=1 // pred_check_branch
      %32 = sbr.rel (0) target = $region9
    $region8: #{tpu_custom_call.1} parent=1 // pred_region
      %s33 = sadd.s32 0, 0
      %s34 = smul.u32 2, %s33
      %36 = vsyncadd [#allocation6], 0
      %s37 = smul.addr %s34, 8
      %s38 = scalar_lea.hbm %s1, %s37
      %s40 = sshll.u32 %s38, 4
      %s41 = int_to_ptr.hbm [resolvable:$true] %s40
      %s42 = sshll.u32 [#allocation5], 4
      %s43 = int_to_ptr.vmem [resolvable:$true] %s42
      %45 = dma.hbm_to_vmem [thread:$0]  %s41, 256, %s43, [#allocation6]
    $region9: #{tpu_custom_call.1} parent=1 // pred_fallthru
      _
    // Predicated region
    $region10: #{tpu_custom_call.1} parent=1 // pred_check
      _
    $region11: #{tpu_custom_call.1} parent=1 // pred_check_branch
      %47 = sbr.rel (0) target = $region13
    $region12: #{tpu_custom_call.1} parent=1 // pred_region
      %49 = dma.done [#allocation3], 256
    $region13: #{tpu_custom_call.1} parent=1 // pred_fallthru
      _
    // Predicated region
    $region14: #{tpu_custom_call.1} parent=1 // pred_check
      _
    $region15: #{tpu_custom_call.1} parent=1 // pred_check_branch
      %51 = sbr.rel (0) target = $region17
    $region16: #{tpu_custom_call.1} parent=1 // pred_region
      %53 = dma.done [#allocation6], 256
    $region17: #{tpu_custom_call.1} parent=1 // pred_fallthru
      _
    %s54 = sadd.s32 0, 0
    %s55 = smul.u32 2, %s54
    %s56 = sadd.s32 0, 0
    %s57 = smul.u32 2, %s56
    %p58 = scmp.eq.s32.totalorder 0, 0
    // Predicated region
    $region18: #{tpu_custom_call.1} parent=1 // pred_check
      %p59 = pneg %p58
    $region19: #{tpu_custom_call.1} parent=1 // pred_check_branch
      %61 = sbr.rel (%p59) target = $region21
    $region20: #{tpu_custom_call.1} parent=1 // pred_region
      %vm62 = vcmask 0
      %63 = vst.msk [vmem:[#allocation7] sm:$0x1] %vm62, inf
      %64 = vst.msk [vmem:[#allocation8] sm:$0x1] %vm62, -inf
      %65 = vst.msk [vmem:[#allocation10] sm:$0x1] %vm62, inf
      %66 = vst.msk [vmem:[#allocation11] sm:$0x1] %vm62, -inf
    $region21: #{tpu_custom_call.1} parent=1 // pred_fallthru
      _
    %v67 = vld [vmem:[#allocation2] sm:$0xff]
    %v68 = vld [vmem:[#allocation2 + $0x8] sm:$0xff]
    %v69 = vld [vmem:[#allocation5] sm:$0xff]
    %v70 = vld [vmem:[#allocation5 + $0x8] sm:$0xff]
    %v71 = vld [vmem:[#allocation7] sm:$0x1]
    %v72 = vmin.f32 %v67, %v68
    %73 = vmin.xlane.f32.xlu0 %v72
    %v74 = vpop.xlane.xlu0 %73
    %v75 = vrot.slane %v74, 4
    %v76 = vmin.f32 %v74, %v75
    %v77 = vrot.slane %v76, 2
    %v78 = vmin.f32 %v76, %v77
    %v79 = vrot.slane %v78, 1
    %v80 = vmin.f32 %v78, %v79
    %s81 = vtos %v80
    %v82 = vstv %s81
    %v83 = vmin.f32 %v71, %v82
    %vm84 = vcmask 0
    %85 = vst.msk [vmem:[#allocation7] sm:$0x1] %vm84, %v83
    %v86 = vld [vmem:[#allocation8] sm:$0x1]
    %v87 = vmax.f32 %v67, %v68
    %88 = vmax.xlane.f32.xlu0 %v87
    %v89 = vpop.xlane.xlu0 %88
    %v90 = vrot.slane %v89, 4
    %v91 = vmax.f32 %v89, %v90
    %v92 = vrot.slane %v91, 2
    %v93 = vmax.f32 %v91, %v92
    %v94 = vrot.slane %v93, 1
    %v95 = vmax.f32 %v93, %v94
    %s96 = vtos %v95
    %v97 = vstv %s96
    %v98 = vmax.f32 %v86, %v97
    %99 = vst.msk [vmem:[#allocation8] sm:$0x1] %vm84, %v98
    %v100 = vld [vmem:[#allocation10] sm:$0x1]
    %v101 = vmin.f32 %v69, %v70
    %102 = vmin.xlane.f32.xlu0 %v101
    %v103 = vpop.xlane.xlu0 %102
    %v104 = vrot.slane %v103, 4
    %v105 = vmin.f32 %v103, %v104
    %v106 = vrot.slane %v105, 2
    %v107 = vmin.f32 %v105, %v106
    %v108 = vrot.slane %v107, 1
    %v109 = vmin.f32 %v107, %v108
    %s110 = vtos %v109
    %v111 = vstv %s110
    %v112 = vmin.f32 %v100, %v111
    %113 = vst.msk [vmem:[#allocation10] sm:$0x1] %vm84, %v112
    %v114 = vld [vmem:[#allocation11] sm:$0x1]
    %v115 = vmax.f32 %v69, %v70
    %116 = vmax.xlane.f32.xlu0 %v115
    %v117 = vpop.xlane.xlu0 %116
    %v118 = vrot.slane %v117, 4
    %v119 = vmax.f32 %v117, %v118
    %v120 = vrot.slane %v119, 2
    %v121 = vmax.f32 %v119, %v120
    %v122 = vrot.slane %v121, 1
    %v123 = vmax.f32 %v121, %v122
    %s124 = vtos %v123
    %v125 = vstv %s124
    %v126 = vmax.f32 %v114, %v125
    %127 = vst.msk [vmem:[#allocation11] sm:$0x1] %vm84, %v126
    // Predicated region
    $region22: #{tpu_custom_call.1} parent=1 // pred_check
      _
    $region23: #{tpu_custom_call.1} parent=1 // pred_check_branch
      %129 = sbr.rel (0) target = $region25
    $region24: #{tpu_custom_call.1} parent=1 // pred_region
      %131 = vsyncadd [#allocation4], 0
      %s133 = sshll.u32 [#allocation7], 4
      %s134 = int_to_ptr.vmem [resolvable:$true] %s133
      %s135 = sshll.u32 %s2, 4
      %s136 = int_to_ptr.hbm [resolvable:$true] %s135
      %138 = dma.vmem_to_hbm [thread:$0]  %s134, 16, %s136, [#allocation4]
    $region25: #{tpu_custom_call.1} parent=1 // pred_fallthru
      _
    // Predicated region
    $region26: #{tpu_custom_call.1} parent=1 // pred_check
      _
    $region27: #{tpu_custom_call.1} parent=1 // pred_check_branch
      %140 = sbr.rel (0) target = $region29
    $region28: #{tpu_custom_call.1} parent=1 // pred_region
      %142 = vsyncadd [#allocation9], 0
      %s144 = sshll.u32 [#allocation8], 4
      %s145 = int_to_ptr.vmem [resolvable:$true] %s144
      %s146 = sshll.u32 %s3, 4
      %s147 = int_to_ptr.hbm [resolvable:$true] %s146
      %149 = dma.vmem_to_hbm [thread:$0]  %s145, 16, %s147, [#allocation9]
    $region29: #{tpu_custom_call.1} parent=1 // pred_fallthru
      _
    // Predicated region
    $region30: #{tpu_custom_call.1} parent=1 // pred_check
      _
    $region31: #{tpu_custom_call.1} parent=1 // pred_check_branch
      %151 = sbr.rel (0) target = $region33
    $region32: #{tpu_custom_call.1} parent=1 // pred_region
      %153 = vsyncadd [#allocation9], 0
      %s155 = sshll.u32 [#allocation10], 4
      %s156 = int_to_ptr.vmem [resolvable:$true] %s155
      %s157 = sshll.u32 %s4, 4
      %s158 = int_to_ptr.hbm [resolvable:$true] %s157
      %160 = dma.vmem_to_hbm [thread:$0]  %s156, 16, %s158, [#allocation9]
    $region33: #{tpu_custom_call.1} parent=1 // pred_fallthru
      _
    // Predicated region
    $region34: #{tpu_custom_call.1} parent=1 // pred_check
      _
    $region35: #{tpu_custom_call.1} parent=1 // pred_check_branch
      %162 = sbr.rel (0) target = $region37
    $region36: #{tpu_custom_call.1} parent=1 // pred_region
      %164 = vsyncadd [#allocation12], 0
      %s166 = sshll.u32 [#allocation11], 4
      %s167 = int_to_ptr.vmem [resolvable:$true] %s166
      %s168 = sshll.u32 %s5, 4
      %s169 = int_to_ptr.hbm [resolvable:$true] %s168
      %171 = dma.vmem_to_hbm [thread:$0]  %s167, 16, %s169, [#allocation12]
    $region37: #{tpu_custom_call.1} parent=1 // pred_fallthru
      _
    // Predicated region
    $region38: #{tpu_custom_call.1} parent=1 // pred_check
      _
    $region39: #{tpu_custom_call.1} parent=1 // pred_check_branch
      %173 = sbr.rel (0) target = $region41
    $region40: #{tpu_custom_call.1} parent=1 // pred_region
      %175 = dma.done [#allocation4], 16
    $region41: #{tpu_custom_call.1} parent=1 // pred_fallthru
      _
    // Predicated region
    $region42: #{tpu_custom_call.1} parent=1 // pred_check
      _
    $region43: #{tpu_custom_call.1} parent=1 // pred_check_branch
      %177 = sbr.rel (0) target = $region45
    $region44: #{tpu_custom_call.1} parent=1 // pred_region
      %179 = dma.done [#allocation9], 16
    $region45: #{tpu_custom_call.1} parent=1 // pred_fallthru
      _
    // Predicated region
    $region46: #{tpu_custom_call.1} parent=1 // pred_check
      _
    $region47: #{tpu_custom_call.1} parent=1 // pred_check_branch
      %181 = sbr.rel (0) target = $region49
    $region48: #{tpu_custom_call.1} parent=1 // pred_region
      %183 = dma.done [#allocation9], 16
    $region49: #{tpu_custom_call.1} parent=1 // pred_fallthru
      _
    // Predicated region
    $region50: #{tpu_custom_call.1} parent=1 // pred_check
      _
    $region51: #{tpu_custom_call.1} parent=1 // pred_check_branch
      %185 = sbr.rel (0) target = $region53
    $region52: #{tpu_custom_call.1} parent=1 // pred_region
      %187 = dma.done [#allocation12], 16
    $region53: #{tpu_custom_call.1} parent=1 // pred_fallthru
      _
    %188 = vsyncpa [#allocation3], 1
    %189 = vsyncpa [#allocation6], 1
    %190 = vsyncpa [#allocation4], 1
    %191 = vsyncpa [#allocation9], 1
    %192 = vsyncpa [#allocation12], 1

</llo_original>
